<compile_context>
chip_gen: v7x
topology: tpu7x:2x2x1
jax: 0.10.0
libtpu: 0.0.40
codegen_flags: <defaults>
</compile_context>

<pallas_src>
import jax
import jax.numpy as jnp
from jax.experimental import pallas as pl
from jax.experimental.pallas import tpu as pltpu

HIDDEN_UNITS = [64, 128, 64]
LN_EPS = 1e-5
LANES = 128


def _dueling_dqn_kernel(x_ref, w_ref, vec_ref, out_ref):
    sd = x_ref.shape[1]      # real state_dim  (static)
    ad = out_ref.shape[1]    # real action_dim (static)

    def matmul(h, i, k=LANES):
        # bf16 MXU operands, f32 accumulation; contract over k real rows only.
        return jnp.dot(h.astype(jnp.bfloat16), w_ref[i, :k, :],
                       preferred_element_type=jnp.float32)

    def layernorm(h, n_real, g, be):
        # One pass: sum and sum-of-squares. Padded lanes of h are exactly 0, so
        # they do not perturb the statistics; divisor is the REAL feature count.
        # Clamp var >= 0: E[x^2]-E[x]^2 can go slightly negative under bf16
        # matmul rounding when a layer's pre-LN activations are near-constant.
        inv_n = 1.0 / n_real
        s1 = jnp.sum(h, axis=-1, keepdims=True)
        s2 = jnp.sum(h * h, axis=-1, keepdims=True)
        mu = s1 * inv_n
        var = jnp.maximum(s2 * inv_n - mu * mu, 0.0)
        # Padded lanes have gamma=0, beta=0 -> remain exactly 0 after LN.
        return (h - mu) * jax.lax.rsqrt(var + LN_EPS) * g + be

    # feature_layer: 3 x [Linear -> LayerNorm -> ReLU -> Dropout(identity)].
    # Layer 0 contracts over the unpadded state_dim (no in-kernel lane pad).
    h = x_ref[...]                                         # (bt, state_dim) f32
    h = matmul(h, 0, k=sd) + vec_ref[0:1, :]
    h = jnp.maximum(layernorm(h, HIDDEN_UNITS[0], vec_ref[1:2, :], vec_ref[2:3, :]), 0.0)
    for i, n_real in enumerate(HIDDEN_UNITS[1:], start=1):
        b = vec_ref[3 * i + 0:3 * i + 1, :]
        g = vec_ref[3 * i + 1:3 * i + 2, :]
        be = vec_ref[3 * i + 2:3 * i + 3, :]
        h = jnp.maximum(layernorm(matmul(h, i) + b, n_real, g, be), 0.0)

    # fused value/advantage hidden layer: cols 0..31 value, 32..63 advantage
    h = jnp.maximum(matmul(h, 3) + vec_ref[9:10, :], 0.0)

    # fused block-diagonal head: cols 0..A-1 = advantages, col A = value
    out = matmul(h, 4) + vec_ref[10:11, :]

    # coef row: +1 at the V lane, -1/action_dim at the advantage lanes, 0 else
    #   corr = V - mean(A);   Q = A + corr  (lives in lanes 0..A-1)
    corr = jnp.sum(out * vec_ref[11:12, :], axis=-1, keepdims=True)
    out_ref[...] = (out + corr)[:, :ad]


def pack_params(params, action_dim):
    """Pack the 20 unpadded parameter arrays into two kernel operands."""
    (w1, b1, g1, be1, w2, b2, g2, be2, w3, b3, g3, be3,
     wv1, bv1, wv2, bv2, wa1, ba1, wa2, ba2) = params

    def pad_mat(w):
        z = jnp.zeros((LANES, LANES), jnp.float32)
        return z.at[:w.shape[0], :w.shape[1]].set(w)

    def pad_row(v):
        v = jnp.asarray(v).reshape(-1)
        return jnp.zeros((LANES,), jnp.float32).at[:v.shape[0]].set(v)

    # Head layer 1: [wv1 | wa1] -> (64, 64), biases concatenated likewise.
    wh1 = jnp.concatenate([wv1, wa1], axis=1)
    bh1 = jnp.concatenate([bv1, ba1], axis=1)

    # Head layer 2: block diagonal. Rows 0..31 (value hidden) feed column
    # `action_dim` with wv2; rows 32..63 (adv hidden) feed cols 0..A-1 with wa2.
    wh2 = jnp.zeros((LANES, LANES), jnp.float32)
    wh2 = wh2.at[0:32, action_dim].set(wv2.reshape(-1))
    wh2 = wh2.at[32:64, 0:action_dim].set(wa2)
    bh2 = jnp.zeros((LANES,), jnp.float32)
    bh2 = bh2.at[0:action_dim].set(ba2.reshape(-1))
    bh2 = bh2.at[action_dim].set(bv2.reshape(-1)[0])

    # Dueling-combine coefficients (masked mean uses the real action_dim).
    coef = jnp.zeros((LANES,), jnp.float32)
    coef = coef.at[0:action_dim].set(-1.0 / action_dim)
    coef = coef.at[action_dim].set(1.0)

    w_slab = jnp.stack(
        [pad_mat(w1), pad_mat(w2), pad_mat(w3), pad_mat(wh1), wh2]
    ).astype(jnp.bfloat16)                                    # (5, 128, 128)
    vec_slab = jnp.stack(
        [pad_row(b1), pad_row(g1), pad_row(be1),
         pad_row(b2), pad_row(g2), pad_row(be2),
         pad_row(b3), pad_row(g3), pad_row(be3),
         pad_row(bh1), bh2, coef])                            # (12, 128)
    return w_slab, vec_slab


def dueling_dqn_forward(x, w_slab, vec_slab, action_dim, batch_tile=2048):
    """x: (batch, state_dim) f32.  Returns (batch, action_dim) f32 Q-values."""
    batch, state_dim = x.shape
    assert state_dim <= LANES, "state_dim > 128 not supported by this packing"
    assert action_dim < LANES, "action_dim must be < 128 (V lane sits at index action_dim)"

    # Batch tile: multiples of 8 sublanes, large to amortize per-step overhead,
    # but keep >= 2 grid steps when the batch allows it (v7x has 2 TensorCores).
    bp8 = ((batch + 7) // 8) * 8
    bt = max(8, (min(batch_tile, bp8) // 8) * 8)
    if bp8 // bt < 2 and bp8 >= 16:
        bt = max(8, ((bp8 // 2 + 7) // 8) * 8)
    batch_pad = ((batch + bt - 1) // bt) * bt

    x_in = x
    if batch_pad != batch:
        x_in = jnp.zeros((batch_pad, state_dim), x.dtype).at[:batch].set(x)

    flops = 2 * 5 * LANES * LANES * batch_pad
    bytes_accessed = (batch_pad * state_dim * 4 + batch_pad * action_dim * 4
                      + w_slab.size * 2 + vec_slab.size * 4)
    cost = pl.CostEstimate(flops=flops, transcendentals=3 * batch_pad,
                           bytes_accessed=bytes_accessed)

    # Raise scoped VMEM only when very large tiles demand it.
    vmem_need = (8 * bt * LANES * 4
                 + 2 * bt * (state_dim + action_dim) * 4
                 + w_slab.size * 2 + vec_slab.size * 4)
    cp_kwargs = dict(dimension_semantics=("parallel",))
    if vmem_need > 14 * 2 ** 20:
        cp_kwargs["vmem_limit_bytes"] = min(vmem_need + (4 << 20), 60 << 20)

    out = pl.pallas_call(
        _dueling_dqn_kernel,
        out_shape=jax.ShapeDtypeStruct((batch_pad, action_dim), jnp.float32),
        grid=(batch_pad // bt,),
        in_specs=[
            pl.BlockSpec((bt, state_dim), lambda i: (i, 0)),
            pl.BlockSpec((5, LANES, LANES), lambda i: (0, 0, 0),
                         pipeline_mode=pl.Buffered(1)),   # weights resident
            pl.BlockSpec((12, LANES), lambda i: (0, 0),
                         pipeline_mode=pl.Buffered(1)),   # vectors resident
        ],
        out_specs=pl.BlockSpec((bt, action_dim), lambda i: (i, 0)),
        compiler_params=pltpu.CompilerParams(**cp_kwargs),
        cost_estimate=cost,
    )(x_in, w_slab, vec_slab)
    return out[:batch]


def init_params(key, state_dim, action_dim, hidden_units=HIDDEN_UNITS):
    """Mirror the PyTorch init: orthogonal Linear weights (gain=1), bias=0.1,
    LayerNorm gamma=1, beta=0. Weights are stored pre-transposed (in, out)."""
    ortho = jax.nn.initializers.orthogonal(scale=1.0)

    def linear(key, fan_in, fan_out):
        w = ortho(key, (fan_in, fan_out), jnp.float32)
        b = jnp.full((1, fan_out), 0.1, jnp.float32)
        return w, b

    keys = jax.random.split(key, 8)
    params = []
    in_f = state_dim
    for i, units in enumerate(hidden_units):
        w, b = linear(keys[i], in_f, units)
        params += [w, b, jnp.ones((1, units), jnp.float32),
                   jnp.zeros((1, units), jnp.float32)]
        in_f = units
    wv1, bv1 = linear(keys[3], in_f, 32)
    wv2, bv2 = linear(keys[4], 32, 1)
    wa1, ba1 = linear(keys[5], in_f, 32)
    wa2, ba2 = linear(keys[6], 32, action_dim)
    params += [wv1, bv1, wv2, bv2, wa1, ba1, wa2, ba2]
    return tuple(params)


def reference_forward(x, params):
    """Pure-JAX f32 reference (unpadded, unfused) for correctness checking."""
    (w1, b1, g1, be1, w2, b2, g2, be2, w3, b3, g3, be3,
     wv1, bv1, wv2, bv2, wa1, ba1, wa2, ba2) = params

    def ln(h, g, be):
        mu = jnp.mean(h, axis=-1, keepdims=True)
        var = jnp.mean((h - mu) ** 2, axis=-1, keepdims=True)
        return (h - mu) / jnp.sqrt(var + LN_EPS) * g + be

    h = x
    for w, b, g, be in ((w1, b1, g1, be1), (w2, b2, g2, be2), (w3, b3, g3, be3)):
        h = jnp.maximum(ln(h @ w + b, g, be), 0.0)
    v = jnp.maximum(h @ wv1 + bv1, 0.0) @ wv2 + bv2
    a = jnp.maximum(h @ wa1 + ba1, 0.0) @ wa2 + ba2
    return v + (a - jnp.mean(a, axis=1, keepdims=True))


if __name__ == "__main__":
    batch, state_dim, action_dim = 16, 16, 4

    key = jax.random.PRNGKey(0)
    k_x, k_p = jax.random.split(key)
    x = jax.random.normal(k_x, (batch, state_dim), jnp.float32)
    params = init_params(k_p, state_dim, action_dim)
    w_slab, vec_slab = pack_params(params, action_dim)

    # batch=16 -> bt=8, grid=(2,): exercises the parallel batch-grid path.
    q = dueling_dqn_forward(x, w_slab, vec_slab, action_dim)
    q = jax.block_until_ready(q)

    q_ref = reference_forward(x, params)
    assert q.shape == (batch, action_dim)
    # bf16 MXU operands (f32 accumulate) -> loosened elementwise tolerance.
    assert jnp.allclose(q, q_ref, atol=5e-2, rtol=5e-2), "mismatch vs reference"

    print("KERNEL_OK")
</pallas_src>

<mosaic_0001>
module attributes {stable_mosaic.version = 11 : i64} {
  func.func @_dueling_dqn_kernel(%arg0: i32, %arg1: memref<8x16xf32, #tpu.memory_space<vmem>>, %arg2: memref<5x128x128xbf16, #tpu.memory_space<vmem>>, %arg3: memref<12x128xf32, #tpu.memory_space<vmem>>, %arg4: memref<8x4xf32, #tpu.memory_space<vmem>>) attributes {dimension_semantics = [#tpu.dimension_semantics<parallel>], iteration_bounds = array<i64: 2>, scalar_prefetch = 0 : i64, scratch_operands = 0 : i64, tpu.core_type = #tpu.core_type<tc>, window_params = [{transform_indices = @transform_0, window_bounds = array<i64: 8, 16>}, {pipeline_mode = #tpu.pipeline_mode<synchronous>, transform_indices = @transform_1, window_bounds = array<i64: 5, 128, 128>}, {pipeline_mode = #tpu.pipeline_mode<synchronous>, transform_indices = @transform_2, window_bounds = array<i64: 12, 128>}, {transform_indices = @transform_3, window_bounds = array<i64: 8, 4>}]} {
    %c0 = arith.constant 0 : index
    %c0_0 = arith.constant 0 : index
    %0 = vector.load %arg1[%c0, %c0_0] : memref<8x16xf32, #tpu.memory_space<vmem>>, vector<8x16xf32>
    %1 = arith.truncf %0 : vector<8x16xf32> to vector<8x16xbf16>
    %c0_1 = arith.constant 0 : index
    %c0_2 = arith.constant 0 : index
    %c0_3 = arith.constant 0 : index
    %2 = vector.load %arg2[%c0_1, %c0_2, %c0_3] : memref<5x128x128xbf16, #tpu.memory_space<vmem>>, vector<1x16x128xbf16>
    %3 = vector.shape_cast %2 : vector<1x16x128xbf16> to vector<16x128xbf16>
    %cst = arith.constant dense<0.000000e+00> : vector<8x128xf32>
    %4 = tpu.matmul %1, %3, %cst {dimension_numbers = #tpu.dot_dimension_numbers<[1], [0], [0], [1], [0, 0, 1, 1], [], []>} : vector<8x16xbf16>, vector<16x128xbf16>, vector<8x128xf32> -> vector<8x128xf32>
    %c0_4 = arith.constant 0 : index
    %c0_5 = arith.constant 0 : index
    %5 = vector.load %arg3[%c0_4, %c0_5] : memref<12x128xf32, #tpu.memory_space<vmem>>, vector<1x128xf32>
    %6 = vector.broadcast %5 : vector<1x128xf32> to vector<8x128xf32>
    %7 = arith.addf %4, %6 : vector<8x128xf32>
    %c1 = arith.constant 1 : index
    %c0_6 = arith.constant 0 : index
    %8 = vector.load %arg3[%c1, %c0_6] : memref<12x128xf32, #tpu.memory_space<vmem>>, vector<1x128xf32>
    %c2 = arith.constant 2 : index
    %c0_7 = arith.constant 0 : index
    %9 = vector.load %arg3[%c2, %c0_7] : memref<12x128xf32, #tpu.memory_space<vmem>>, vector<1x128xf32>
    %cst_8 = arith.constant dense<0.000000e+00> : vector<8xf32>
    %10 = vector.multi_reduction <add>, %7, %cst_8 [1] : vector<8x128xf32> to vector<8xf32>
    %11 = vector.shape_cast %10 : vector<8xf32> to vector<8x1xf32>
    %12 = arith.mulf %7, %7 : vector<8x128xf32>
    %cst_9 = arith.constant dense<0.000000e+00> : vector<8xf32>
    %13 = vector.multi_reduction <add>, %12, %cst_9 [1] : vector<8x128xf32> to vector<8xf32>
    %14 = vector.shape_cast %13 : vector<8xf32> to vector<8x1xf32>
    %cst_10 = arith.constant 1.562500e-02 : f32
    %15 = vector.broadcast %cst_10 : f32 to vector<8x1xf32>
    %16 = arith.mulf %11, %15 : vector<8x1xf32>
    %cst_11 = arith.constant 1.562500e-02 : f32
    %17 = vector.broadcast %cst_11 : f32 to vector<8x1xf32>
    %18 = arith.mulf %14, %17 : vector<8x1xf32>
    %19 = arith.mulf %16, %16 : vector<8x1xf32>
    %20 = arith.subf %18, %19 : vector<8x1xf32>
    %cst_12 = arith.constant 0.000000e+00 : f32
    %21 = vector.broadcast %cst_12 : f32 to vector<8x1xf32>
    %22 = arith.maximumf %20, %21 : vector<8x1xf32>
    %23 = vector.broadcast %16 : vector<8x1xf32> to vector<8x128xf32>
    %24 = arith.subf %7, %23 : vector<8x128xf32>
    %cst_13 = arith.constant 9.99999974E-6 : f32
    %25 = vector.broadcast %cst_13 : f32 to vector<8x1xf32>
    %26 = arith.addf %22, %25 : vector<8x1xf32>
    %27 = math.rsqrt %26 : vector<8x1xf32>
    %28 = vector.broadcast %27 : vector<8x1xf32> to vector<8x128xf32>
    %29 = arith.mulf %24, %28 : vector<8x128xf32>
    %30 = vector.broadcast %8 : vector<1x128xf32> to vector<8x128xf32>
    %31 = arith.mulf %29, %30 : vector<8x128xf32>
    %32 = vector.broadcast %9 : vector<1x128xf32> to vector<8x128xf32>
    %33 = arith.addf %31, %32 : vector<8x128xf32>
    %cst_14 = arith.constant 0.000000e+00 : f32
    %34 = vector.broadcast %cst_14 : f32 to vector<8x128xf32>
    %35 = arith.maximumf %33, %34 : vector<8x128xf32>
    %c3 = arith.constant 3 : index
    %c0_15 = arith.constant 0 : index
    %36 = vector.load %arg3[%c3, %c0_15] : memref<12x128xf32, #tpu.memory_space<vmem>>, vector<1x128xf32>
    %c4 = arith.constant 4 : index
    %c0_16 = arith.constant 0 : index
    %37 = vector.load %arg3[%c4, %c0_16] : memref<12x128xf32, #tpu.memory_space<vmem>>, vector<1x128xf32>
    %c5 = arith.constant 5 : index
    %c0_17 = arith.constant 0 : index
    %38 = vector.load %arg3[%c5, %c0_17] : memref<12x128xf32, #tpu.memory_space<vmem>>, vector<1x128xf32>
    %39 = arith.truncf %35 : vector<8x128xf32> to vector<8x128xbf16>
    %c1_18 = arith.constant 1 : index
    %c0_19 = arith.constant 0 : index
    %c0_20 = arith.constant 0 : index
    %40 = vector.load %arg2[%c1_18, %c0_19, %c0_20] : memref<5x128x128xbf16, #tpu.memory_space<vmem>>, vector<1x128x128xbf16>
    %41 = vector.shape_cast %40 : vector<1x128x128xbf16> to vector<128x128xbf16>
    %cst_21 = arith.constant dense<0.000000e+00> : vector<8x128xf32>
    %42 = tpu.matmul %39, %41, %cst_21 {dimension_numbers = #tpu.dot_dimension_numbers<[1], [0], [0], [1], [0, 0, 1, 1], [], []>} : vector<8x128xbf16>, vector<128x128xbf16>, vector<8x128xf32> -> vector<8x128xf32>
    %43 = vector.broadcast %36 : vector<1x128xf32> to vector<8x128xf32>
    %44 = arith.addf %42, %43 : vector<8x128xf32>
    %cst_22 = arith.constant dense<0.000000e+00> : vector<8xf32>
    %45 = vector.multi_reduction <add>, %44, %cst_22 [1] : vector<8x128xf32> to vector<8xf32>
    %46 = vector.shape_cast %45 : vector<8xf32> to vector<8x1xf32>
    %47 = arith.mulf %44, %44 : vector<8x128xf32>
    %cst_23 = arith.constant dense<0.000000e+00> : vector<8xf32>
    %48 = vector.multi_reduction <add>, %47, %cst_23 [1] : vector<8x128xf32> to vector<8xf32>
    %49 = vector.shape_cast %48 : vector<8xf32> to vector<8x1xf32>
    %cst_24 = arith.constant 7.812500e-03 : f32
    %50 = vector.broadcast %cst_24 : f32 to vector<8x1xf32>
    %51 = arith.mulf %46, %50 : vector<8x1xf32>
    %cst_25 = arith.constant 7.812500e-03 : f32
    %52 = vector.broadcast %cst_25 : f32 to vector<8x1xf32>
    %53 = arith.mulf %49, %52 : vector<8x1xf32>
    %54 = arith.mulf %51, %51 : vector<8x1xf32>
    %55 = arith.subf %53, %54 : vector<8x1xf32>
    %cst_26 = arith.constant 0.000000e+00 : f32
    %56 = vector.broadcast %cst_26 : f32 to vector<8x1xf32>
    %57 = arith.maximumf %55, %56 : vector<8x1xf32>
    %58 = vector.broadcast %51 : vector<8x1xf32> to vector<8x128xf32>
    %59 = arith.subf %44, %58 : vector<8x128xf32>
    %cst_27 = arith.constant 9.99999974E-6 : f32
    %60 = vector.broadcast %cst_27 : f32 to vector<8x1xf32>
    %61 = arith.addf %57, %60 : vector<8x1xf32>
    %62 = math.rsqrt %61 : vector<8x1xf32>
    %63 = vector.broadcast %62 : vector<8x1xf32> to vector<8x128xf32>
    %64 = arith.mulf %59, %63 : vector<8x128xf32>
    %65 = vector.broadcast %37 : vector<1x128xf32> to vector<8x128xf32>
    %66 = arith.mulf %64, %65 : vector<8x128xf32>
    %67 = vector.broadcast %38 : vector<1x128xf32> to vector<8x128xf32>
    %68 = arith.addf %66, %67 : vector<8x128xf32>
    %cst_28 = arith.constant 0.000000e+00 : f32
    %69 = vector.broadcast %cst_28 : f32 to vector<8x128xf32>
    %70 = arith.maximumf %68, %69 : vector<8x128xf32>
    %c6 = arith.constant 6 : index
    %c0_29 = arith.constant 0 : index
    %71 = vector.load %arg3[%c6, %c0_29] : memref<12x128xf32, #tpu.memory_space<vmem>>, vector<1x128xf32>
    %c7 = arith.constant 7 : index
    %c0_30 = arith.constant 0 : index
    %72 = vector.load %arg3[%c7, %c0_30] : memref<12x128xf32, #tpu.memory_space<vmem>>, vector<1x128xf32>
    %c8 = arith.constant 8 : index
    %c0_31 = arith.constant 0 : index
    %73 = vector.load %arg3[%c8, %c0_31] : memref<12x128xf32, #tpu.memory_space<vmem>>, vector<1x128xf32>
    %74 = arith.truncf %70 : vector<8x128xf32> to vector<8x128xbf16>
    %c2_32 = arith.constant 2 : index
    %c0_33 = arith.constant 0 : index
    %c0_34 = arith.constant 0 : index
    %75 = vector.load %arg2[%c2_32, %c0_33, %c0_34] : memref<5x128x128xbf16, #tpu.memory_space<vmem>>, vector<1x128x128xbf16>
    %76 = vector.shape_cast %75 : vector<1x128x128xbf16> to vector<128x128xbf16>
    %cst_35 = arith.constant dense<0.000000e+00> : vector<8x128xf32>
    %77 = tpu.matmul %74, %76, %cst_35 {dimension_numbers = #tpu.dot_dimension_numbers<[1], [0], [0], [1], [0, 0, 1, 1], [], []>} : vector<8x128xbf16>, vector<128x128xbf16>, vector<8x128xf32> -> vector<8x128xf32>
    %78 = vector.broadcast %71 : vector<1x128xf32> to vector<8x128xf32>
    %79 = arith.addf %77, %78 : vector<8x128xf32>
    %cst_36 = arith.constant dense<0.000000e+00> : vector<8xf32>
    %80 = vector.multi_reduction <add>, %79, %cst_36 [1] : vector<8x128xf32> to vector<8xf32>
    %81 = vector.shape_cast %80 : vector<8xf32> to vector<8x1xf32>
    %82 = arith.mulf %79, %79 : vector<8x128xf32>
    %cst_37 = arith.constant dense<0.000000e+00> : vector<8xf32>
    %83 = vector.multi_reduction <add>, %82, %cst_37 [1] : vector<8x128xf32> to vector<8xf32>
    %84 = vector.shape_cast %83 : vector<8xf32> to vector<8x1xf32>
    %cst_38 = arith.constant 1.562500e-02 : f32
    %85 = vector.broadcast %cst_38 : f32 to vector<8x1xf32>
    %86 = arith.mulf %81, %85 : vector<8x1xf32>
    %cst_39 = arith.constant 1.562500e-02 : f32
    %87 = vector.broadcast %cst_39 : f32 to vector<8x1xf32>
    %88 = arith.mulf %84, %87 : vector<8x1xf32>
    %89 = arith.mulf %86, %86 : vector<8x1xf32>
    %90 = arith.subf %88, %89 : vector<8x1xf32>
    %cst_40 = arith.constant 0.000000e+00 : f32
    %91 = vector.broadcast %cst_40 : f32 to vector<8x1xf32>
    %92 = arith.maximumf %90, %91 : vector<8x1xf32>
    %93 = vector.broadcast %86 : vector<8x1xf32> to vector<8x128xf32>
    %94 = arith.subf %79, %93 : vector<8x128xf32>
    %cst_41 = arith.constant 9.99999974E-6 : f32
    %95 = vector.broadcast %cst_41 : f32 to vector<8x1xf32>
    %96 = arith.addf %92, %95 : vector<8x1xf32>
    %97 = math.rsqrt %96 : vector<8x1xf32>
    %98 = vector.broadcast %97 : vector<8x1xf32> to vector<8x128xf32>
    %99 = arith.mulf %94, %98 : vector<8x128xf32>
    %100 = vector.broadcast %72 : vector<1x128xf32> to vector<8x128xf32>
    %101 = arith.mulf %99, %100 : vector<8x128xf32>
    %102 = vector.broadcast %73 : vector<1x128xf32> to vector<8x128xf32>
    %103 = arith.addf %101, %102 : vector<8x128xf32>
    %cst_42 = arith.constant 0.000000e+00 : f32
    %104 = vector.broadcast %cst_42 : f32 to vector<8x128xf32>
    %105 = arith.maximumf %103, %104 : vector<8x128xf32>
    %106 = arith.truncf %105 : vector<8x128xf32> to vector<8x128xbf16>
    %c3_43 = arith.constant 3 : index
    %c0_44 = arith.constant 0 : index
    %c0_45 = arith.constant 0 : index
    %107 = vector.load %arg2[%c3_43, %c0_44, %c0_45] : memref<5x128x128xbf16, #tpu.memory_space<vmem>>, vector<1x128x128xbf16>
    %108 = vector.shape_cast %107 : vector<1x128x128xbf16> to vector<128x128xbf16>
    %cst_46 = arith.constant dense<0.000000e+00> : vector<8x128xf32>
    %109 = tpu.matmul %106, %108, %cst_46 {dimension_numbers = #tpu.dot_dimension_numbers<[1], [0], [0], [1], [0, 0, 1, 1], [], []>} : vector<8x128xbf16>, vector<128x128xbf16>, vector<8x128xf32> -> vector<8x128xf32>
    %c9 = arith.constant 9 : index
    %c0_47 = arith.constant 0 : index
    %110 = vector.load %arg3[%c9, %c0_47] : memref<12x128xf32, #tpu.memory_space<vmem>>, vector<1x128xf32>
    %111 = vector.broadcast %110 : vector<1x128xf32> to vector<8x128xf32>
    %112 = arith.addf %109, %111 : vector<8x128xf32>
    %cst_48 = arith.constant 0.000000e+00 : f32
    %113 = vector.broadcast %cst_48 : f32 to vector<8x128xf32>
    %114 = arith.maximumf %112, %113 : vector<8x128xf32>
    %115 = arith.truncf %114 : vector<8x128xf32> to vector<8x128xbf16>
    %c4_49 = arith.constant 4 : index
    %c0_50 = arith.constant 0 : index
    %c0_51 = arith.constant 0 : index
    %116 = vector.load %arg2[%c4_49, %c0_50, %c0_51] : memref<5x128x128xbf16, #tpu.memory_space<vmem>>, vector<1x128x128xbf16>
    %117 = vector.shape_cast %116 : vector<1x128x128xbf16> to vector<128x128xbf16>
    %cst_52 = arith.constant dense<0.000000e+00> : vector<8x128xf32>
    %118 = tpu.matmul %115, %117, %cst_52 {dimension_numbers = #tpu.dot_dimension_numbers<[1], [0], [0], [1], [0, 0, 1, 1], [], []>} : vector<8x128xbf16>, vector<128x128xbf16>, vector<8x128xf32> -> vector<8x128xf32>
    %c10 = arith.constant 10 : index
    %c0_53 = arith.constant 0 : index
    %119 = vector.load %arg3[%c10, %c0_53] : memref<12x128xf32, #tpu.memory_space<vmem>>, vector<1x128xf32>
    %120 = vector.broadcast %119 : vector<1x128xf32> to vector<8x128xf32>
    %121 = arith.addf %118, %120 : vector<8x128xf32>
    %c11 = arith.constant 11 : index
    %c0_54 = arith.constant 0 : index
    %122 = vector.load %arg3[%c11, %c0_54] : memref<12x128xf32, #tpu.memory_space<vmem>>, vector<1x128xf32>
    %123 = vector.broadcast %122 : vector<1x128xf32> to vector<8x128xf32>
    %124 = arith.mulf %121, %123 : vector<8x128xf32>
    %cst_55 = arith.constant dense<0.000000e+00> : vector<8xf32>
    %125 = vector.multi_reduction <add>, %124, %cst_55 [1] : vector<8x128xf32> to vector<8xf32>
    %126 = vector.shape_cast %125 : vector<8xf32> to vector<8x1xf32>
    %127 = vector.broadcast %126 : vector<8x1xf32> to vector<8x128xf32>
    %128 = arith.addf %121, %127 : vector<8x128xf32>
    %129 = vector.extract_strided_slice %128 {offsets = [0, 0], sizes = [8, 4], strides = [1, 1]} : vector<8x128xf32> to vector<8x4xf32>
    %c0_56 = arith.constant 0 : index
    %c0_57 = arith.constant 0 : index
    %130 = vector.load %arg4[%c0_56, %c0_57] : memref<8x4xf32, #tpu.memory_space<vmem>>, vector<8x4xf32>
    tpu.vector_store %arg4[%c0_56, %c0_57], %129 {strides = array<i32>} : memref<8x4xf32, #tpu.memory_space<vmem>>, vector<8x4xf32>,
    return
  }
  func.func @transform_0(%arg0: i32) -> (i32, i32) {
    %c0_i32 = arith.constant 0 : i32
    %c0_i32_0 = arith.constant 0 : i32
    return %arg0, %c0_i32 : i32, i32
  }
  func.func @transform_1(%arg0: i32) -> (i32, i32, i32) {
    %c0_i32 = arith.constant 0 : i32
    %c0_i32_0 = arith.constant 0 : i32
    %c0_i32_1 = arith.constant 0 : i32
    %c0_i32_2 = arith.constant 0 : i32
    return %c0_i32, %c0_i32_0, %c0_i32_1 : i32, i32, i32
  }
  func.func @transform_2(%arg0: i32) -> (i32, i32) {
    %c0_i32 = arith.constant 0 : i32
    %c0_i32_0 = arith.constant 0 : i32
    %c0_i32_1 = arith.constant 0 : i32
    return %c0_i32, %c0_i32_0 : i32, i32
  }
  func.func @transform_3(%arg0: i32) -> (i32, i32) {
    %c0_i32 = arith.constant 0 : i32
    %c0_i32_0 = arith.constant 0 : i32
    return %arg0, %c0_i32 : i32, i32
  }
}

</mosaic_0001>

<llo_original>
// kernel: tpu_custom_call.1
$region0: #{tpu_custom_call.1}
  #allocation0 [shape = 'u32[]', space=smem, size = 0x4, offset = 0x4, fixed_abs, tag = 'smem constant byte address 0x4 - core index']
  #allocation1 [shape = 'u32[144,128]{1,0:T(1,128)}', space=vmem, size = 0x12000, scoped, tag = 'internal scratch']
  %s0 = inlined_call_operand.hbm [shape: f32[16,16], index: 0, kind: input, shape index: {}]
  %s1 = inlined_call_operand.hbm [shape: bf16[5,128,128], index: 1, kind: input, shape index: {}]
  %s2 = inlined_call_operand.hbm [shape: f32[12,128], index: 2, kind: input, shape index: {}]
  %s3 = inlined_call_operand.vmem [shape: f32[16,4], index: 3, kind: output, shape index: {}]
  %s4 = sld [smem:[#allocation0]]
  $region57: #{tpu_custom_call.1} parent=0
    _
  %s6 = ssub.s32 1, %s4
  %s7 = scalar_select 0, %s6, %s4
  $region1: #{tpu_custom_call.1} parent=0
    #allocation2 [shape = 'u8[8192]{0}', space=vmem, size = 0x2000, scoped, tag = 'input window, operand 0']
    #allocation3 [shape = 's32[2]{0}', space=sflag, size = 0x8, scoped, tag = 'scoped memory for tpu_custom_call.1']
    #allocation4 [shape = 'u8[163840]{0}', space=vmem, size = 0x28000, scoped, tag = 'input window, operand 1, single buffered']
    #allocation5 [shape = 's32[1]{0}', space=sflag, size = 0x4, scoped, tag = 'scoped memory for tpu_custom_call.1']
    #allocation6 [shape = 'u8[8192]{0}', space=vmem, size = 0x2000, scoped, tag = 'input window, operand 2, single buffered']
    %8 = vsyncpa [#allocation3], 0
    %s9 = scalar_lea.sflag [#allocation3], 1
    %10 = vsyncpa %s9, 0
    %11 = vsyncpa [#allocation5], 0
    loop: start=0, step=1, limit=4
    $region2: #{tpu_custom_call.1} parent=1 // loop_pre_header
      _
    $region3: #{tpu_custom_call.1} parent=1 // loop_header
      %s13 = sphi 0, %s17
      %p14 = scmp.ge.s32.totalorder %s13, 4
      %s23 = sphi 0, %s25
      %s26 = sphi 0, %s23
      %s27 = sphi 0, %s26
      %s43 = sphi 0, %s27
      %s47 = sphi 0, %s47
      %s49 = sphi 0, %s47
      %s50 = sphi 0, %s49
      %s64 = sphi 0, %s50
      %s68 = sphi 0, %s68
      %s70 = sphi 0, %s68
      %s71 = sphi 0, %s70
      %s85 = sphi 0, %s71
      %s91 = sphi 0, %s93
      %s94 = sphi 0, %s91
      %s95 = sphi 0, %s94
      %s111 = sphi 0, %s95
    $region4: #{tpu_custom_call.1} parent=1 // loop_header_branch
      %16 = sbr.rel (%p14) target = $region8
    $region5: #{tpu_custom_call.1} parent=1 // loop_body
      %s18 = ssub.s32 %s13, 1
      %s19 = ssub.s32 %s13, 2
      %s20 = sadd.s32 %s13, 1
      %s21 = ssub.s32 %s13, %s20
      %p22 = scmp.eq.s32.totalorder %s21, 0
      %s24 = sadd.s32 %s23, 1
      %s25 = scalar_select %p22, %s23, %s24
      %p28 = pneg %p22
      %p29 = scmp.eq.s32.totalorder %s13, 1
      %p30 = por %p28, %p29
      %p31 = scmp.ne.s32.totalorder %s23, %s26
      %p32 = scmp.eq.s32.totalorder %s13, 0
      %p33 = por %p31, %p32
      %p34 = scmp.ne.s32.totalorder %s23, %s26
      %p35 = scmp.eq.s32.totalorder %s18, 1
      %p36 = por %p34, %p35
      %p37 = scmp.ne.s32.totalorder %s26, %s27
      %p38 = scmp.eq.s32.totalorder %s18, 0
      %p39 = por %p37, %p38
      %p40 = scmp.ne.s32.totalorder %s26, %s27
      %p41 = scmp.eq.s32.totalorder %s19, 1
      %p42 = por %p40, %p41
      %p44 = scmp.ne.s32.totalorder %s27, %s43
      %p45 = scmp.eq.s32.totalorder %s19, 0
      %p46 = por %p44, %p45
      %s48 = sadd.s32 %s47, 1
      %p51 = scmp.eq.s32.totalorder %s13, 1
      %p52 = scmp.ne.s32.totalorder %s47, %s49
      %p53 = scmp.eq.s32.totalorder %s13, 0
      %p54 = por %p52, %p53
      %p55 = scmp.ne.s32.totalorder %s47, %s49
      %p56 = scmp.eq.s32.totalorder %s18, 1
      %p57 = por %p55, %p56
      %p58 = scmp.ne.s32.totalorder %s49, %s50
      %p59 = scmp.eq.s32.totalorder %s18, 0
      %p60 = por %p58, %p59
      %p61 = scmp.ne.s32.totalorder %s49, %s50
      %p62 = scmp.eq.s32.totalorder %s19, 1
      %p63 = por %p61, %p62
      %p65 = scmp.ne.s32.totalorder %s50, %s64
      %p66 = scmp.eq.s32.totalorder %s19, 0
      %p67 = por %p65, %p66
      %s69 = sadd.s32 %s68, 1
      %p72 = scmp.eq.s32.totalorder %s13, 1
      %p73 = scmp.ne.s32.totalorder %s68, %s70
      %p74 = scmp.eq.s32.totalorder %s13, 0
      %p75 = por %p73, %p74
      %p76 = scmp.ne.s32.totalorder %s68, %s70
      %p77 = scmp.eq.s32.totalorder %s18, 1
      %p78 = por %p76, %p77
      %p79 = scmp.ne.s32.totalorder %s70, %s71
      %p80 = scmp.eq.s32.totalorder %s18, 0
      %p81 = por %p79, %p80
      %p82 = scmp.ne.s32.totalorder %s70, %s71
      %p83 = scmp.eq.s32.totalorder %s19, 1
      %p84 = por %p82, %p83
      %p86 = scmp.ne.s32.totalorder %s71, %s85
      %p87 = scmp.eq.s32.totalorder %s19, 0
      %p88 = por %p86, %p87
      %s89 = ssub.s32 %s13, %s20
      %p90 = scmp.eq.s32.totalorder %s89, 0
      %s92 = sadd.s32 %s91, 1
      %s93 = scalar_select %p90, %s91, %s92
      %p96 = pneg %p90
      %p97 = scmp.eq.s32.totalorder %s13, 1
      %p98 = por %p96, %p97
      %p99 = scmp.ne.s32.totalorder %s91, %s94
      %p100 = scmp.eq.s32.totalorder %s13, 0
      %p101 = por %p99, %p100
      %p102 = scmp.ne.s32.totalorder %s91, %s94
      %p103 = scmp.eq.s32.totalorder %s18, 1
      %p104 = por %p102, %p103
      %p105 = scmp.ne.s32.totalorder %s94, %s95
      %p106 = scmp.eq.s32.totalorder %s18, 0
      %p107 = por %p105, %p106
      %p108 = scmp.ne.s32.totalorder %s94, %s95
      %p109 = scmp.eq.s32.totalorder %s19, 1
      %p110 = por %p108, %p109
      %p112 = scmp.ne.s32.totalorder %s95, %s111
      %p113 = scmp.eq.s32.totalorder %s19, 0
      %p114 = por %p112, %p113
      %p115 = scmp.le.s32.totalorder 1, %s13
      %p116 = scmp.lt.s32.totalorder %s13, 3
      %p117 = pnand %p115, %p116
      %p118 = pneg %p117
      // Predicated region
      $region9: #{tpu_custom_call.1} parent=5 // pred_check
        _
      $region10: #{tpu_custom_call.1} parent=5 // pred_check_branch
        %120 = sbr.rel (%p117) target = $region12
      $region11: #{tpu_custom_call.1} parent=5 // pred_region
        %s121 = ssub.s32 %s13, 1
        // Predicated region
        $region13: #{tpu_custom_call.1} parent=11 // pred_check
          %p122 = pneg %p60
        $region14: #{tpu_custom_call.1} parent=11 // pred_check_branch
          %124 = sbr.rel (%p122) target = $region16
        $region15: #{tpu_custom_call.1} parent=11 // pred_region
          %s126 = ssub.s32 5120, 5120
          %127 = vsyncadd [#allocation5], %s126
          %s128 = sshll.u32 [#allocation4], 4
          %s129 = int_to_ptr.vmem [resolvable:$true] %s128
          %134 = dma.hbm_to_vmem [thread:$0]  %s1, 5120, %s129, [#allocation5], 64, 64, 4
        $region16: #{tpu_custom_call.1} parent=11 // pred_fallthru
          _
        // Predicated region
        $region17: #{tpu_custom_call.1} parent=11 // pred_check
          %p135 = pneg %p81
        $region18: #{tpu_custom_call.1} parent=11 // pred_check_branch
          %137 = sbr.rel (%p135) target = $region20
        $region19: #{tpu_custom_call.1} parent=11 // pred_region
          %s139 = ssub.s32 256, 256
          %140 = vsyncadd [#allocation5], %s139
          %s141 = sshll.u32 [#allocation6], 4
          %s142 = int_to_ptr.vmem [resolvable:$true] %s141
          %147 = dma.hbm_to_vmem [thread:$0]  %s2, 256, %s142, [#allocation5], 128, 128, 8
        $region20: #{tpu_custom_call.1} parent=11 // pred_fallthru
          _
      $region12: #{tpu_custom_call.1} parent=5 // pred_fallthru
        _
      %p148 = scmp.lt.s32.totalorder %s13, 2
      // Predicated region
      $region21: #{tpu_custom_call.1} parent=5 // pred_check
        %p149 = pneg %p148
      $region22: #{tpu_custom_call.1} parent=5 // pred_check_branch
        %151 = sbr.rel (%p149) target = $region24
      $region23: #{tpu_custom_call.1} parent=5 // pred_region
        // Predicated region
        $region25: #{tpu_custom_call.1} parent=23 // pred_check
          %p152 = pneg %p33
        $region26: #{tpu_custom_call.1} parent=23 // pred_check_branch
          %154 = sbr.rel (%p152) target = $region28
        $region27: #{tpu_custom_call.1} parent=23 // pred_region
          %s155 = sand.u32 %s23, 1
          %s156 = scalar_lea.sflag [#allocation3], %s155
          %s157 = sand.u32 %s23, 1
          %s158 = smul.addr %s157, 8
          %s159 = scalar_lea.vmem [#allocation2], %s158
          %s161 = ssub.s32 128, 128
          %162 = vsyncadd %s156, %s161
          %s163 = smul.addr %s13, 128
          %s164 = scalar_lea.hbm %s0, %s163
          %s166 = sshll.u32 %s159, 4
          %s167 = int_to_ptr.vmem [resolvable:$true] %s166
          %169 = dma.hbm_to_vmem [thread:$0]  %s164, 128, %s167, %s156
        $region28: #{tpu_custom_call.1} parent=23 // pred_fallthru
          _
      $region24: #{tpu_custom_call.1} parent=5 // pred_fallthru
        _
      %p170 = scmp.le.s32.totalorder 1, %s13
      %p171 = scmp.lt.s32.totalorder %s13, 3
      %p172 = pnand %p170, %p171
      %p173 = pneg %p172
      // Predicated region
      $region29: #{tpu_custom_call.1} parent=5 // pred_check
        _
      $region30: #{tpu_custom_call.1} parent=5 // pred_check_branch
        %175 = sbr.rel (%p172) target = $region32
      $region31: #{tpu_custom_call.1} parent=5 // pred_region
        %s176 = ssub.s32 %s13, 1
        %s177 = sand.u32 %s26, 1
        %s178 = scalar_lea.sflag [#allocation3], %s177
        %s179 = sand.u32 %s26, 1
        %s180 = smul.addr %s179, 8
        %s181 = scalar_lea.vmem [#allocation2], %s180
        // Predicated region
        $region33: #{tpu_custom_call.1} parent=31 // pred_check
          %p182 = pneg %p39
        $region34: #{tpu_custom_call.1} parent=31 // pred_check_branch
          %184 = sbr.rel (%p182) target = $region36
        $region35: #{tpu_custom_call.1} parent=31 // pred_region
          %185 = dma.done %s178, 128
        $region36: #{tpu_custom_call.1} parent=31 // pred_fallthru
          _
        // Predicated region
        $region37: #{tpu_custom_call.1} parent=31 // pred_check
          %p186 = pneg %p60
        $region38: #{tpu_custom_call.1} parent=31 // pred_check_branch
          %188 = sbr.rel (%p186) target = $region40
        $region39: #{tpu_custom_call.1} parent=31 // pred_region
          %189 = dma.done [#allocation5], 5120
        $region40: #{tpu_custom_call.1} parent=31 // pred_fallthru
          _
        // Predicated region
        $region41: #{tpu_custom_call.1} parent=31 // pred_check
          %p190 = pneg %p81
        $region42: #{tpu_custom_call.1} parent=31 // pred_check_branch
          %192 = sbr.rel (%p190) target = $region44
        $region43: #{tpu_custom_call.1} parent=31 // pred_region
          %193 = dma.done [#allocation5], 256
        $region44: #{tpu_custom_call.1} parent=31 // pred_fallthru
          _
        %s194 = sand.u32 %s26, 1
        %s195 = scalar_lea.sflag [#allocation3], %s194
        %s196 = sand.u32 %s26, 1
        %s197 = smul.addr %s196, 8
        %s198 = scalar_lea.vmem [#allocation2], %s197
        %p199 = pneg %p39
        %p200 = pneg %p36
        %p201 = pneg %p60
        %p202 = pneg %p57
        %p203 = pneg %p81
        %p204 = pneg %p78
        %p205 = pneg %p107
        %p206 = pneg %p104
        %p207 = scmp.lt.s32.totalorder %s18, 1
        %s208 = scalar_select %p207, %s18, 1
        %s209 = smul.addr %s208, 8
        %s210 = scalar_lea.vmem %s3, %s209
        %p211 = scmp.lt.s32.totalorder %s18, 1
        %s212 = scalar_select %p211, %s18, 1
        %s213 = smul.addr %s212, 8
        %s214 = scalar_lea.vmem %s3, %s213
        %v216 = vld [vmem:[%s181] sm:$0xff]
        %v217 = vpack.c.bf16 %v216, %v216
        %v218 = vld [vmem:[#allocation4] sm:$0xf]
        %v219 = vld [vmem:[#allocation4 + $0x4] sm:$0xf]
        %v220 = vld [vmem:[#allocation6] sm:$0x1]
        %v221 = vlaneseq
        %v222 = vshrl.u32 %v221, 7
        %v223 = vsub.s32 0, %v222
        %v224 = vrot.slane %v220, %v223
        %v227 = vunpack.c.l.b16 %v218
        %v228 = vunpack.c.l.b16 %v219
        %v229 = vpack.c.b16 %v228, %v227
        %vm231 = vcmask 130048
        %v233 = vsel %vm231, %v217, 0
        %235 = vmatprep.subr.bf16.mxu0 0
        %236 = vmatpush1.bf16.msra.mxu0 %v229
        %237 = vmatprep.subr.bf16.mxu0 0
        %238 = vmatpush1.bf16.msra.mxu0 0
        %239 = vmatprep.subr.bf16.mxu0 0
        %240 = vmatpush1.bf16.msra.mxu0 0
        %241 = vmatprep.subr.bf16.mxu0 0
        %242 = vmatpush1.bf16.msra.mxu0 0
        %243 = vmatprep.subr.bf16.mxu0 0
        %244 = vmatpush1.bf16.msra.mxu0 0
        %245 = vmatprep.subr.bf16.mxu0 0
        %246 = vmatpush1.bf16.msra.mxu0 0
        %247 = vmatprep.subr.bf16.mxu0 0
        %248 = vmatpush1.bf16.msra.mxu0 0
        %249 = vmatprep.subr.bf16.mxu0 0
        %250 = vmatpush1.bf16.msra.mxu0 0
        %251 = vmatprep.subr.bf16.mxu0 0
        %252 = vmatpush1.bf16.msra.mxu0 0
        %253 = vmatprep.subr.bf16.mxu0 0
        %254 = vmatpush1.bf16.msra.mxu0 0
        %255 = vmatprep.subr.bf16.mxu0 0
        %256 = vmatpush1.bf16.msra.mxu0 0
        %257 = vmatprep.subr.bf16.mxu0 0
        %258 = vmatpush1.bf16.msra.mxu0 0
        %259 = vmatprep.subr.bf16.mxu0 0
        %260 = vmatpush1.bf16.msra.mxu0 0
        %261 = vmatprep.subr.bf16.mxu0 0
        %262 = vmatpush1.bf16.msra.mxu0 0
        %263 = vmatprep.subr.bf16.mxu0 0
        %264 = vmatpush1.bf16.msra.mxu0 0
        %265 = vmatprep.subr.bf16.mxu0 0
        %266 = vmatpush1.bf16.msra.mxu0 0
        %267 = vmatprep.mubr.bf16.mxu0 0
        %268 = vmatmul.mubr.bf16.gmra.mrb[0].mxu0 %v233
        %v269 = vpop.f32.mrb[0].mxu0
        %v270 = vadd.f32 %v224, %v269
        %v271 = vpop.f32.mrb[0].mxu0
        %v272 = vpop.f32.mrb[0].mxu0
        %v273 = vpop.f32.mrb[0].mxu0
        %274 = vdwg.mxu0
        %v275 = vld [vmem:[#allocation6 + $0x1] sm:$0x1]
        %v276 = vld [vmem:[#allocation6 + $0x2] sm:$0x1]
        %277 = vadd.xlane.f32.xlu0 %v270
        %v278 = vpop.xlane.xlu0 %277
        %v279 = vmul.f32 %v270, %v270
        %280 = vadd.xlane.f32.xlu0 %v279
        %v281 = vpop.xlane.xlu0 %280
        %v282 = vmul.f32 %v278, 0.015625
        %v283 = vmul.f32 %v281, 0.015625
        %v284 = vmul.f32 %v282, %v282
        %v285 = vsub.f32 %v283, %v284
        %v286 = vmax.f32 %v285, 0.0
        %v287 = vsub.f32 %v270, %v282
        %v288 = vadd.f32 %v286, 1e-05
        %v289 = vrsqrt.pop %v288
        %v290 = vmul.f32 %v287, %v289
        %v291 = vlaneseq
        %v292 = vshrl.u32 %v291, 7
        %v293 = vsub.s32 0, %v292
        %v294 = vrot.slane %v275, %v293
        %v295 = vmul.f32 %v290, %v294
        %v296 = vlaneseq
        %v297 = vshrl.u32 %v296, 7
        %v298 = vsub.s32 0, %v297
        %v299 = vrot.slane %v276, %v298
        %v300 = vadd.f32 %v295, %v299
        %v301 = vmax.f32 %v300, 0.0
        %v302 = vld [vmem:[#allocation6 + $0x3] sm:$0x1]
        %v303 = vld [vmem:[#allocation6 + $0x4] sm:$0x1]
        %v304 = vld [vmem:[#allocation6 + $0x5] sm:$0x1]
        %v305 = vpack.c.bf16 %v301, %v301
        %s306 = scalar_lea.vmem [#allocation4], 64
        %v307 = vld [vmem:[%s306] sm:$0xf]
        %v308 = vld [vmem:[%s306 + $0x4] sm:$0xf]
        %v309 = vld [vmem:[%s306 + $0x8] sm:$0xf]
        %v310 = vld [vmem:[%s306 + $0xc] sm:$0xf]
        %v311 = vld [vmem:[%s306 + $0x10] sm:$0xf]
        %v312 = vld [vmem:[%s306 + $0x14] sm:$0xf]
        %v313 = vld [vmem:[%s306 + $0x18] sm:$0xf]
        %v314 = vld [vmem:[%s306 + $0x1c] sm:$0xf]
        %v315 = vld [vmem:[%s306 + $0x20] sm:$0xf]
        %v316 = vld [vmem:[%s306 + $0x24] sm:$0xf]
        %v317 = vld [vmem:[%s306 + $0x28] sm:$0xf]
        %v318 = vld [vmem:[%s306 + $0x2c] sm:$0xf]
        %v319 = vld [vmem:[%s306 + $0x30] sm:$0xf]
        %v320 = vld [vmem:[%s306 + $0x34] sm:$0xf]
        %v321 = vld [vmem:[%s306 + $0x38] sm:$0xf]
        %v322 = vld [vmem:[%s306 + $0x3c] sm:$0xf]
        %v323 = vlaneseq
        %v324 = vshrl.u32 %v323, 7
        %v325 = vsub.s32 0, %v324
        %v326 = vrot.slane %v302, %v325
        %v343 = vunpack.c.l.b16 %v307
        %v344 = vunpack.c.l.b16 %v308
        %v345 = vunpack.c.l.b16 %v309
        %v346 = vunpack.c.l.b16 %v310
        %v347 = vunpack.c.l.b16 %v311
        %v348 = vunpack.c.l.b16 %v312
        %v349 = vunpack.c.l.b16 %v313
        %v350 = vunpack.c.l.b16 %v314
        %v351 = vunpack.c.l.b16 %v315
        %v352 = vunpack.c.l.b16 %v316
        %v353 = vunpack.c.l.b16 %v317
        %v354 = vunpack.c.l.b16 %v318
        %v355 = vunpack.c.l.b16 %v319
        %v356 = vunpack.c.l.b16 %v320
        %v357 = vunpack.c.l.b16 %v321
        %v358 = vunpack.c.l.b16 %v322
        %v359 = vpack.c.b16 %v344, %v343
        %v360 = vpack.c.b16 %v346, %v345
        %v361 = vpack.c.b16 %v348, %v347
        %v362 = vpack.c.b16 %v350, %v349
        %v363 = vpack.c.b16 %v352, %v351
        %v364 = vpack.c.b16 %v354, %v353
        %v365 = vpack.c.b16 %v356, %v355
        %v366 = vpack.c.b16 %v358, %v357
        %375 = vmatprep.subr.bf16.mxu0 0
        %376 = vmatpush1.bf16.msra.mxu0 %v359
        %377 = vmatprep.subr.bf16.mxu0 0
        %378 = vmatpush1.bf16.msra.mxu0 %v360
        %379 = vmatprep.subr.bf16.mxu0 0
        %380 = vmatpush1.bf16.msra.mxu0 %v361
        %381 = vmatprep.subr.bf16.mxu0 0
        %382 = vmatpush1.bf16.msra.mxu0 %v362
        %383 = vmatprep.subr.bf16.mxu0 0
        %384 = vmatpush1.bf16.msra.mxu0 %v363
        %385 = vmatprep.subr.bf16.mxu0 0
        %386 = vmatpush1.bf16.msra.mxu0 %v364
        %387 = vmatprep.subr.bf16.mxu0 0
        %388 = vmatpush1.bf16.msra.mxu0 %v365
        %389 = vmatprep.subr.bf16.mxu0 0
        %390 = vmatpush1.bf16.msra.mxu0 %v366
        %391 = vmatprep.subr.bf16.mxu0 0
        %392 = vmatpush1.bf16.msra.mxu0 0
        %393 = vmatprep.subr.bf16.mxu0 0
        %394 = vmatpush1.bf16.msra.mxu0 0
        %395 = vmatprep.subr.bf16.mxu0 0
        %396 = vmatpush1.bf16.msra.mxu0 0
        %397 = vmatprep.subr.bf16.mxu0 0
        %398 = vmatpush1.bf16.msra.mxu0 0
        %399 = vmatprep.subr.bf16.mxu0 0
        %400 = vmatpush1.bf16.msra.mxu0 0
        %401 = vmatprep.subr.bf16.mxu0 0
        %402 = vmatpush1.bf16.msra.mxu0 0
        %403 = vmatprep.subr.bf16.mxu0 0
        %404 = vmatpush1.bf16.msra.mxu0 0
        %405 = vmatprep.subr.bf16.mxu0 0
        %406 = vmatpush1.bf16.msra.mxu0 0
        %407 = vmatprep.mubr.bf16.mxu0 0
        %408 = vmatmul.mubr.bf16.gmra.mrb[0].mxu0 %v305
        %v409 = vpop.f32.mrb[0].mxu0
        %v410 = vadd.f32 %v326, %v409
        %v411 = vpop.f32.mrb[0].mxu0
        %v412 = vpop.f32.mrb[0].mxu0
        %v413 = vpop.f32.mrb[0].mxu0
        %414 = vdwg.mxu0
        %415 = vadd.xlane.f32.xlu0 %v410
        %v416 = vpop.xlane.xlu0 %415
        %v417 = vmul.f32 %v410, %v410
        %418 = vadd.xlane.f32.xlu0 %v417
        %v419 = vpop.xlane.xlu0 %418
        %v420 = vmul.f32 %v416, 0.0078125
        %v421 = vmul.f32 %v419, 0.0078125
        %v422 = vmul.f32 %v420, %v420
        %v423 = vsub.f32 %v421, %v422
        %v424 = vmax.f32 %v423, 0.0
        %v425 = vsub.f32 %v410, %v420
        %v426 = vadd.f32 %v424, 1e-05
        %v427 = vrsqrt.pop %v426
        %v428 = vmul.f32 %v425, %v427
        %v429 = vlaneseq
        %v430 = vshrl.u32 %v429, 7
        %v431 = vsub.s32 0, %v430
        %v432 = vrot.slane %v303, %v431
        %v433 = vmul.f32 %v428, %v432
        %v434 = vlaneseq
        %v435 = vshrl.u32 %v434, 7
        %v436 = vsub.s32 0, %v435
        %v437 = vrot.slane %v304, %v436
        %v438 = vadd.f32 %v433, %v437
        %v439 = vmax.f32 %v438, 0.0
        %v440 = vld [vmem:[#allocation6 + $0x6] sm:$0x1]
        %v441 = vld [vmem:[#allocation6 + $0x7] sm:$0x1]
        %v442 = vld [vmem:[#allocation6 + $0x8] sm:$0x1]
        %v443 = vpack.c.bf16 %v439, %v439
        %s444 = scalar_lea.vmem [#allocation4], 128
        %v445 = vld [vmem:[%s444] sm:$0xf]
        %v446 = vld [vmem:[%s444 + $0x4] sm:$0xf]
        %v447 = vld [vmem:[%s444 + $0x8] sm:$0xf]
        %v448 = vld [vmem:[%s444 + $0xc] sm:$0xf]
        %v449 = vld [vmem:[%s444 + $0x10] sm:$0xf]
        %v450 = vld [vmem:[%s444 + $0x14] sm:$0xf]
        %v451 = vld [vmem:[%s444 + $0x18] sm:$0xf]
        %v452 = vld [vmem:[%s444 + $0x1c] sm:$0xf]
        %v453 = vld [vmem:[%s444 + $0x20] sm:$0xf]
        %v454 = vld [vmem:[%s444 + $0x24] sm:$0xf]
        %v455 = vld [vmem:[%s444 + $0x28] sm:$0xf]
        %v456 = vld [vmem:[%s444 + $0x2c] sm:$0xf]
        %v457 = vld [vmem:[%s444 + $0x30] sm:$0xf]
        %v458 = vld [vmem:[%s444 + $0x34] sm:$0xf]
        %v459 = vld [vmem:[%s444 + $0x38] sm:$0xf]
        %v460 = vld [vmem:[%s444 + $0x3c] sm:$0xf]
        %v461 = vlaneseq
        %v462 = vshrl.u32 %v461, 7
        %v463 = vsub.s32 0, %v462
        %v464 = vrot.slane %v440, %v463
        %v481 = vunpack.c.l.b16 %v445
        %v482 = vunpack.c.l.b16 %v446
        %v483 = vunpack.c.l.b16 %v447
        %v484 = vunpack.c.l.b16 %v448
        %v485 = vunpack.c.l.b16 %v449
        %v486 = vunpack.c.l.b16 %v450
        %v487 = vunpack.c.l.b16 %v451
        %v488 = vunpack.c.l.b16 %v452
        %v489 = vunpack.c.l.b16 %v453
        %v490 = vunpack.c.l.b16 %v454
        %v491 = vunpack.c.l.b16 %v455
        %v492 = vunpack.c.l.b16 %v456
        %v493 = vunpack.c.l.b16 %v457
        %v494 = vunpack.c.l.b16 %v458
        %v495 = vunpack.c.l.b16 %v459
        %v496 = vunpack.c.l.b16 %v460
        %v497 = vpack.c.b16 %v482, %v481
        %v498 = vpack.c.b16 %v484, %v483
        %v499 = vpack.c.b16 %v486, %v485
        %v500 = vpack.c.b16 %v488, %v487
        %v501 = vpack.c.b16 %v490, %v489
        %v502 = vpack.c.b16 %v492, %v491
        %v503 = vpack.c.b16 %v494, %v493
        %v504 = vpack.c.b16 %v496, %v495
        %513 = vmatprep.subr.bf16.mxu0 0
        %514 = vmatpush1.bf16.msra.mxu0 %v497
        %515 = vmatprep.subr.bf16.mxu0 0
        %516 = vmatpush1.bf16.msra.mxu0 %v498
        %517 = vmatprep.subr.bf16.mxu0 0
        %518 = vmatpush1.bf16.msra.mxu0 %v499
        %519 = vmatprep.subr.bf16.mxu0 0
        %520 = vmatpush1.bf16.msra.mxu0 %v500
        %521 = vmatprep.subr.bf16.mxu0 0
        %522 = vmatpush1.bf16.msra.mxu0 %v501
        %523 = vmatprep.subr.bf16.mxu0 0
        %524 = vmatpush1.bf16.msra.mxu0 %v502
        %525 = vmatprep.subr.bf16.mxu0 0
        %526 = vmatpush1.bf16.msra.mxu0 %v503
        %527 = vmatprep.subr.bf16.mxu0 0
        %528 = vmatpush1.bf16.msra.mxu0 %v504
        %529 = vmatprep.subr.bf16.mxu0 0
        %530 = vmatpush1.bf16.msra.mxu0 0
        %531 = vmatprep.subr.bf16.mxu0 0
        %532 = vmatpush1.bf16.msra.mxu0 0
        %533 = vmatprep.subr.bf16.mxu0 0
        %534 = vmatpush1.bf16.msra.mxu0 0
        %535 = vmatprep.subr.bf16.mxu0 0
        %536 = vmatpush1.bf16.msra.mxu0 0
        %537 = vmatprep.subr.bf16.mxu0 0
        %538 = vmatpush1.bf16.msra.mxu0 0
        %539 = vmatprep.subr.bf16.mxu0 0
        %540 = vmatpush1.bf16.msra.mxu0 0
        %541 = vmatprep.subr.bf16.mxu0 0
        %542 = vmatpush1.bf16.msra.mxu0 0
        %543 = vmatprep.subr.bf16.mxu0 0
        %544 = vmatpush1.bf16.msra.mxu0 0
        %545 = vmatprep.mubr.bf16.mxu0 0
        %546 = vmatmul.mubr.bf16.gmra.mrb[0].mxu0 %v443
        %v547 = vpop.f32.mrb[0].mxu0
        %v548 = vadd.f32 %v464, %v547
        %v549 = vpop.f32.mrb[0].mxu0
        %v550 = vpop.f32.mrb[0].mxu0
        %v551 = vpop.f32.mrb[0].mxu0
        %552 = vdwg.mxu0
        %553 = vadd.xlane.f32.xlu0 %v548
        %v554 = vpop.xlane.xlu0 %553
        %v555 = vmul.f32 %v548, %v548
        %556 = vadd.xlane.f32.xlu0 %v555
        %v557 = vpop.xlane.xlu0 %556
        %v558 = vmul.f32 %v554, 0.015625
        %v559 = vmul.f32 %v557, 0.015625
        %v560 = vmul.f32 %v558, %v558
        %v561 = vsub.f32 %v559, %v560
        %v562 = vmax.f32 %v561, 0.0
        %v563 = vsub.f32 %v548, %v558
        %v564 = vadd.f32 %v562, 1e-05
        %v565 = vrsqrt.pop %v564
        %v566 = vmul.f32 %v563, %v565
        %v567 = vlaneseq
        %v568 = vshrl.u32 %v567, 7
        %v569 = vsub.s32 0, %v568
        %v570 = vrot.slane %v441, %v569
        %v571 = vmul.f32 %v566, %v570
        %v572 = vlaneseq
        %v573 = vshrl.u32 %v572, 7
        %v574 = vsub.s32 0, %v573
        %v575 = vrot.slane %v442, %v574
        %v576 = vadd.f32 %v571, %v575
        %v577 = vmax.f32 %v576, 0.0
        %v578 = vpack.c.bf16 %v577, %v577
        %s579 = scalar_lea.vmem [#allocation4], 192
        %v580 = vld [vmem:[%s579] sm:$0xf]
        %v581 = vld [vmem:[%s579 + $0x4] sm:$0xf]
        %v582 = vld [vmem:[%s579 + $0x8] sm:$0xf]
        %v583 = vld [vmem:[%s579 + $0xc] sm:$0xf]
        %v584 = vld [vmem:[%s579 + $0x10] sm:$0xf]
        %v585 = vld [vmem:[%s579 + $0x14] sm:$0xf]
        %v586 = vld [vmem:[%s579 + $0x18] sm:$0xf]
        %v587 = vld [vmem:[%s579 + $0x1c] sm:$0xf]
        %v588 = vld [vmem:[%s579 + $0x20] sm:$0xf]
        %v589 = vld [vmem:[%s579 + $0x24] sm:$0xf]
        %v590 = vld [vmem:[%s579 + $0x28] sm:$0xf]
        %v591 = vld [vmem:[%s579 + $0x2c] sm:$0xf]
        %v592 = vld [vmem:[%s579 + $0x30] sm:$0xf]
        %v593 = vld [vmem:[%s579 + $0x34] sm:$0xf]
        %v594 = vld [vmem:[%s579 + $0x38] sm:$0xf]
        %v595 = vld [vmem:[%s579 + $0x3c] sm:$0xf]
        %v596 = vld [vmem:[#allocation6 + $0x9] sm:$0x1]
        %v597 = vlaneseq
        %v598 = vshrl.u32 %v597, 7
        %v599 = vsub.s32 0, %v598
        %v600 = vrot.slane %v596, %v599
        %v617 = vunpack.c.l.b16 %v580
        %v618 = vunpack.c.l.b16 %v581
        %v619 = vunpack.c.l.b16 %v582
        %v620 = vunpack.c.l.b16 %v583
        %v621 = vunpack.c.l.b16 %v584
        %v622 = vunpack.c.l.b16 %v585
        %v623 = vunpack.c.l.b16 %v586
        %v624 = vunpack.c.l.b16 %v587
        %v625 = vunpack.c.l.b16 %v588
        %v626 = vunpack.c.l.b16 %v589
        %v627 = vunpack.c.l.b16 %v590
        %v628 = vunpack.c.l.b16 %v591
        %v629 = vunpack.c.l.b16 %v592
        %v630 = vunpack.c.l.b16 %v593
        %v631 = vunpack.c.l.b16 %v594
        %v632 = vunpack.c.l.b16 %v595
        %v633 = vpack.c.b16 %v618, %v617
        %v634 = vpack.c.b16 %v620, %v619
        %v635 = vpack.c.b16 %v622, %v621
        %v636 = vpack.c.b16 %v624, %v623
        %v637 = vpack.c.b16 %v626, %v625
        %v638 = vpack.c.b16 %v628, %v627
        %v639 = vpack.c.b16 %v630, %v629
        %v640 = vpack.c.b16 %v632, %v631
        %649 = vmatprep.subr.bf16.mxu0 0
        %650 = vmatpush1.bf16.msra.mxu0 %v633
        %651 = vmatprep.subr.bf16.mxu0 0
        %652 = vmatpush1.bf16.msra.mxu0 %v634
        %653 = vmatprep.subr.bf16.mxu0 0
        %654 = vmatpush1.bf16.msra.mxu0 %v635
        %655 = vmatprep.subr.bf16.mxu0 0
        %656 = vmatpush1.bf16.msra.mxu0 %v636
        %657 = vmatprep.subr.bf16.mxu0 0
        %658 = vmatpush1.bf16.msra.mxu0 %v637
        %659 = vmatprep.subr.bf16.mxu0 0
        %660 = vmatpush1.bf16.msra.mxu0 %v638
        %661 = vmatprep.subr.bf16.mxu0 0
        %662 = vmatpush1.bf16.msra.mxu0 %v639
        %663 = vmatprep.subr.bf16.mxu0 0
        %664 = vmatpush1.bf16.msra.mxu0 %v640
        %665 = vmatprep.subr.bf16.mxu0 0
        %666 = vmatpush1.bf16.msra.mxu0 0
        %667 = vmatprep.subr.bf16.mxu0 0
        %668 = vmatpush1.bf16.msra.mxu0 0
        %669 = vmatprep.subr.bf16.mxu0 0
        %670 = vmatpush1.bf16.msra.mxu0 0
        %671 = vmatprep.subr.bf16.mxu0 0
        %672 = vmatpush1.bf16.msra.mxu0 0
        %673 = vmatprep.subr.bf16.mxu0 0
        %674 = vmatpush1.bf16.msra.mxu0 0
        %675 = vmatprep.subr.bf16.mxu0 0
        %676 = vmatpush1.bf16.msra.mxu0 0
        %677 = vmatprep.subr.bf16.mxu0 0
        %678 = vmatpush1.bf16.msra.mxu0 0
        %679 = vmatprep.subr.bf16.mxu0 0
        %680 = vmatpush1.bf16.msra.mxu0 0
        %681 = vmatprep.mubr.bf16.mxu0 0
        %682 = vmatmul.mubr.bf16.gmra.mrb[0].mxu0 %v578
        %v683 = vpop.f32.mrb[0].mxu0
        %v684 = vadd.f32 %v600, %v683
        %v685 = vpop.f32.mrb[0].mxu0
        %v686 = vpop.f32.mrb[0].mxu0
        %v687 = vpop.f32.mrb[0].mxu0
        %688 = vdwg.mxu0
        %v689 = vmax.f32 %v684, 0.0
        %v690 = vpack.c.bf16 %v689, %v689
        %s691 = scalar_lea.vmem [#allocation4], 256
        %v692 = vld [vmem:[%s691] sm:$0xf]
        %v693 = vld [vmem:[%s691 + $0x4] sm:$0xf]
        %v694 = vld [vmem:[%s691 + $0x8] sm:$0xf]
        %v695 = vld [vmem:[%s691 + $0xc] sm:$0xf]
        %v696 = vld [vmem:[%s691 + $0x10] sm:$0xf]
        %v697 = vld [vmem:[%s691 + $0x14] sm:$0xf]
        %v698 = vld [vmem:[%s691 + $0x18] sm:$0xf]
        %v699 = vld [vmem:[%s691 + $0x1c] sm:$0xf]
        %v700 = vld [vmem:[%s691 + $0x20] sm:$0xf]
        %v701 = vld [vmem:[%s691 + $0x24] sm:$0xf]
        %v702 = vld [vmem:[%s691 + $0x28] sm:$0xf]
        %v703 = vld [vmem:[%s691 + $0x2c] sm:$0xf]
        %v704 = vld [vmem:[%s691 + $0x30] sm:$0xf]
        %v705 = vld [vmem:[%s691 + $0x34] sm:$0xf]
        %v706 = vld [vmem:[%s691 + $0x38] sm:$0xf]
        %v707 = vld [vmem:[%s691 + $0x3c] sm:$0xf]
        %v708 = vld [vmem:[#allocation6 + $0xa] sm:$0x1]
        %v709 = vlaneseq
        %v710 = vshrl.u32 %v709, 7
        %v711 = vsub.s32 0, %v710
        %v712 = vrot.slane %v708, %v711
        %v729 = vunpack.c.l.b16 %v692
        %v730 = vunpack.c.l.b16 %v693
        %v731 = vunpack.c.l.b16 %v694
        %v732 = vunpack.c.l.b16 %v695
        %v733 = vunpack.c.l.b16 %v696
        %v734 = vunpack.c.l.b16 %v697
        %v735 = vunpack.c.l.b16 %v698
        %v736 = vunpack.c.l.b16 %v699
        %v737 = vunpack.c.l.b16 %v700
        %v738 = vunpack.c.l.b16 %v701
        %v739 = vunpack.c.l.b16 %v702
        %v740 = vunpack.c.l.b16 %v703
        %v741 = vunpack.c.l.b16 %v704
        %v742 = vunpack.c.l.b16 %v705
        %v743 = vunpack.c.l.b16 %v706
        %v744 = vunpack.c.l.b16 %v707
        %v745 = vpack.c.b16 %v730, %v729
        %v746 = vpack.c.b16 %v732, %v731
        %v747 = vpack.c.b16 %v734, %v733
        %v748 = vpack.c.b16 %v736, %v735
        %v749 = vpack.c.b16 %v738, %v737
        %v750 = vpack.c.b16 %v740, %v739
        %v751 = vpack.c.b16 %v742, %v741
        %v752 = vpack.c.b16 %v744, %v743
        %761 = vmatprep.subr.bf16.mxu0 0
        %762 = vmatpush1.bf16.msra.mxu0 %v745
        %763 = vmatprep.subr.bf16.mxu0 0
        %764 = vmatpush1.bf16.msra.mxu0 %v746
        %765 = vmatprep.subr.bf16.mxu0 0
        %766 = vmatpush1.bf16.msra.mxu0 %v747
        %767 = vmatprep.subr.bf16.mxu0 0
        %768 = vmatpush1.bf16.msra.mxu0 %v748
        %769 = vmatprep.subr.bf16.mxu0 0
        %770 = vmatpush1.bf16.msra.mxu0 %v749
        %771 = vmatprep.subr.bf16.mxu0 0
        %772 = vmatpush1.bf16.msra.mxu0 %v750
        %773 = vmatprep.subr.bf16.mxu0 0
        %774 = vmatpush1.bf16.msra.mxu0 %v751
        %775 = vmatprep.subr.bf16.mxu0 0
        %776 = vmatpush1.bf16.msra.mxu0 %v752
        %777 = vmatprep.subr.bf16.mxu0 0
        %778 = vmatpush1.bf16.msra.mxu0 0
        %779 = vmatprep.subr.bf16.mxu0 0
        %780 = vmatpush1.bf16.msra.mxu0 0
        %781 = vmatprep.subr.bf16.mxu0 0
        %782 = vmatpush1.bf16.msra.mxu0 0
        %783 = vmatprep.subr.bf16.mxu0 0
        %784 = vmatpush1.bf16.msra.mxu0 0
        %785 = vmatprep.subr.bf16.mxu0 0
        %786 = vmatpush1.bf16.msra.mxu0 0
        %787 = vmatprep.subr.bf16.mxu0 0
        %788 = vmatpush1.bf16.msra.mxu0 0
        %789 = vmatprep.subr.bf16.mxu0 0
        %790 = vmatpush1.bf16.msra.mxu0 0
        %791 = vmatprep.subr.bf16.mxu0 0
        %792 = vmatpush1.bf16.msra.mxu0 0
        %793 = vmatprep.mubr.bf16.mxu0 0
        %794 = vmatmul.mubr.bf16.gmra.mrb[0].mxu0 %v690
        %v795 = vpop.f32.mrb[0].mxu0
        %v796 = vadd.f32 %v712, %v795
        %v797 = vpop.f32.mrb[0].mxu0
        %v798 = vpop.f32.mrb[0].mxu0
        %v799 = vpop.f32.mrb[0].mxu0
        %800 = vdwg.mxu0
        %v801 = vld [vmem:[#allocation6 + $0xb] sm:$0x1]
        %v802 = vlaneseq
        %v803 = vshrl.u32 %v802, 7
        %v804 = vsub.s32 0, %v803
        %v805 = vrot.slane %v801, %v804
        %v806 = vmul.f32 %v796, %v805
        %807 = vadd.xlane.f32.xlu0 %v806
        %v808 = vpop.xlane.xlu0 %807
        %v809 = vadd.f32 %v796, %v808
        %vm810 = vcmask 31744
        %811 = vst.msk [vmem:[%s214] sm:$0xff] %vm810, %v809
        %p812 = scmp.lt.s32.totalorder %s18, 1
        %s813 = scalar_select %p812, %s18, 1
        %s814 = smul.addr %s813, 8
        %s815 = scalar_lea.vmem %s3, %s814
        // Predicated region
        $region45: #{tpu_custom_call.1} parent=31 // pred_check
          %p816 = pneg %p104
        $region46: #{tpu_custom_call.1} parent=31 // pred_check_branch
          %818 = sbr.rel (%p816) target = $region48
        $region47: #{tpu_custom_call.1} parent=31 // pred_region
          _
        $region48: #{tpu_custom_call.1} parent=31 // pred_fallthru
          _
      $region32: #{tpu_custom_call.1} parent=5 // pred_fallthru
        _
      %p819 = scmp.le.s32.totalorder 2, %s13
      // Predicated region
      $region49: #{tpu_custom_call.1} parent=5 // pred_check
        %p820 = pneg %p819
      $region50: #{tpu_custom_call.1} parent=5 // pred_check_branch
        %822 = sbr.rel (%p820) target = $region52
      $region51: #{tpu_custom_call.1} parent=5 // pred_region
        %s823 = ssub.s32 %s13, 2
        // Predicated region
        $region53: #{tpu_custom_call.1} parent=51 // pred_check
          %p824 = pneg %p110
        $region54: #{tpu_custom_call.1} parent=51 // pred_check_branch
          %826 = sbr.rel (%p824) target = $region56
        $region55: #{tpu_custom_call.1} parent=51 // pred_region
          %p827 = scmp.lt.s32.totalorder %s19, 1
          %s828 = scalar_select %p827, %s19, 1
          %s829 = smul.addr %s828, 8
          %s830 = scalar_lea.vmem %s3, %s829
        $region56: #{tpu_custom_call.1} parent=51 // pred_fallthru
          _
      $region52: #{tpu_custom_call.1} parent=5 // pred_fallthru
        _
    $region6: #{tpu_custom_call.1} parent=1 // loop_footer
      %s17 = sadd.s32 1, %s13
    $region7: #{tpu_custom_call.1} parent=1 // loop_footer_branch
      %12 = sbr.rel target = $region3
    $region8: #{tpu_custom_call.1} parent=1 // loop_exit
      _
    %831 = vsyncpa [#allocation3], 1
    %s832 = scalar_lea.sflag [#allocation3], 1
    %833 = vsyncpa %s832, 1
    %834 = vsyncpa [#allocation5], 1

</llo_original>
